<compile_context>
chip_gen: v7x
topology: tpu7x:2x2x1
jax: 0.10.0
libtpu: 0.0.40
codegen_flags: <defaults>
</compile_context>

<pallas_src>
import functools

import jax
import jax.numpy as jnp
from jax import lax
from jax.experimental import pallas as pl
from jax.experimental.pallas import tpu as pltpu

ALPHA = 0.09
GAMMA = 2

_LANES = 128
_SUBLANES = 8
# Up to this many (rows, 128) rows (1 MiB f32 per operand) -> single block.
_SINGLE_BLOCK_MAX_ROWS = 2048


def _focal_elementwise(x, t, alpha, gamma):
    """Per-element focal-loss contribution (f32 in / f32 out), soft-target safe."""
    p = jax.nn.sigmoid(x)
    # numerically-stable BCE-with-logits (matches torch's formulation):
    #   ce = max(x, 0) - x*t + log1p(exp(-|x|))
    ce = jnp.maximum(x, 0.0) - x * t + jnp.log1p(jnp.exp(-jnp.abs(x)))
    p_t = p * t + (1.0 - p) * (1.0 - t)
    q = 1.0 - p_t
    g = float(gamma)
    if g == int(g):
        # Integer gamma: repeated multiply on the VPU (exact; avoids the
        # exp(gamma*log(q)) lowering and the 0**float case when p_t -> 1).
        focal = lax.integer_pow(q, int(g))
    else:
        focal = q ** g
    alpha_t = alpha * t + (1.0 - alpha) * (1.0 - t)
    return ce * focal * alpha_t


def _focal_single_kernel(x_ref, t_ref, o_ref, *, alpha, gamma, inv_count):
    # Whole problem in one block: no accumulator, no phase gating.
    x = x_ref[...].astype(jnp.float32)
    t = t_ref[...].astype(jnp.float32)
    contrib = _focal_elementwise(x, t, alpha, gamma)
    o_ref[0, 0] = jnp.sum(contrib) * jnp.float32(inv_count)


def _focal_tiled_kernel(x_ref, t_ref, o_ref, acc_ref, *, alpha, gamma, inv_count):
    i = pl.program_id(0)

    @pl.when(i == 0)
    def _():
        acc_ref[...] = jnp.zeros_like(acc_ref)

    x = x_ref[...].astype(jnp.float32)
    t = t_ref[...].astype(jnp.float32)
    # Vector accumulator: hot loop stays on the VPU; the cross-lane reduce to a
    # scalar is paid exactly once, in the last grid step.
    acc_ref[...] += _focal_elementwise(x, t, alpha, gamma)

    @pl.when(i == pl.num_programs(0) - 1)
    def _():
        o_ref[0, 0] = jnp.sum(acc_ref[...]) * jnp.float32(inv_count)


def focal_loss(inputs, targets, alpha=ALPHA, gamma=GAMMA, row_block=1024):
    """Scalar focal loss over arbitrarily-shaped logits/targets (same shape)."""
    assert inputs.shape == targets.shape
    total = int(inputs.size)
    assert total > 0

    rows_raw = pl.cdiv(total, _LANES)
    # Keep row_block a multiple of 8 (f32 sublane tile), never below 8.
    row_block = max(_SUBLANES, (row_block // _SUBLANES) * _SUBLANES)

    if rows_raw <= _SINGLE_BLOCK_MAX_ROWS:
        rows = pl.cdiv(rows_raw, _SUBLANES) * _SUBLANES
        block_rows = rows
        num_blocks = 1
    else:
        rows = pl.cdiv(rows_raw, row_block) * row_block
        block_rows = row_block
        num_blocks = rows // row_block

    padded_total = rows * _LANES
    x_flat = inputs.reshape(-1).astype(jnp.float32)
    t_flat = targets.reshape(-1).astype(jnp.float32)
    pad = padded_total - total
    if pad:
        # Padding with a very negative logit and target 0 gives an exactly-zero
        # per-element contribution (ce == 0, focal weight == 0 in f32).
        x_flat = jnp.concatenate([x_flat, jnp.full((pad,), -1e4, jnp.float32)])
        t_flat = jnp.concatenate([t_flat, jnp.zeros((pad,), jnp.float32)])
    x2d = x_flat.reshape(rows, _LANES)
    t2d = t_flat.reshape(rows, _LANES)

    inv_count = 1.0 / float(total)  # mean over the ORIGINAL element count

    if num_blocks == 1:
        kernel = functools.partial(
            _focal_single_kernel, alpha=alpha, gamma=gamma, inv_count=inv_count)
        out = pl.pallas_call(
            kernel,
            out_shape=jax.ShapeDtypeStruct((1, 1), jnp.float32),
            grid_spec=pltpu.PrefetchScalarGridSpec(
                num_scalar_prefetch=0,
                grid=(1,),
                in_specs=[
                    pl.BlockSpec((block_rows, _LANES), lambda i: (0, 0)),
                    pl.BlockSpec((block_rows, _LANES), lambda i: (0, 0)),
                ],
                out_specs=pl.BlockSpec((1, 1), lambda i: (0, 0),
                                       memory_space=pltpu.SMEM),
            ),
            compiler_params=pltpu.CompilerParams(
                dimension_semantics=("arbitrary",)),
        )(x2d, t2d)
    else:
        # Tiled path for large inputs: 512 KiB f32 tiles per operand,
        # double-buffered by BlockSpec (2 in x 2 buf x 512 KiB = 2 MiB VMEM).
        # TODO(synk): for v7x, emit per-block partial sums with "parallel"
        # semantics to use both TensorCores; current carried accumulator is
        # serial on one TC.
        kernel = functools.partial(
            _focal_tiled_kernel, alpha=alpha, gamma=gamma, inv_count=inv_count)
        out = pl.pallas_call(
            kernel,
            out_shape=jax.ShapeDtypeStruct((1, 1), jnp.float32),
            grid_spec=pltpu.PrefetchScalarGridSpec(
                num_scalar_prefetch=0,
                grid=(num_blocks,),
                in_specs=[
                    pl.BlockSpec((block_rows, _LANES), lambda i: (i, 0)),
                    pl.BlockSpec((block_rows, _LANES), lambda i: (i, 0)),
                ],
                out_specs=pl.BlockSpec((1, 1), lambda i: (0, 0),
                                       memory_space=pltpu.SMEM),
                scratch_shapes=[pltpu.VMEM((block_rows, _LANES), jnp.float32)],
            ),
            compiler_params=pltpu.CompilerParams(
                dimension_semantics=("arbitrary",)),
        )(x2d, t2d)

    return out[0, 0]


def focal_loss_ref(inputs, targets, alpha=ALPHA, gamma=GAMMA):
    x = inputs.astype(jnp.float32)
    t = targets.astype(jnp.float32)
    p = jax.nn.sigmoid(x)
    ce = jnp.maximum(x, 0.0) - x * t + jnp.log1p(jnp.exp(-jnp.abs(x)))
    p_t = p * t + (1 - p) * (1 - t)
    loss = ce * (1 - p_t) ** gamma
    alpha_t = alpha * t + (1 - alpha) * (1 - t)
    return jnp.mean(loss * alpha_t)


if __name__ == "__main__":
    key = jax.random.PRNGKey(0)
    kx, kt = jax.random.split(key)
    # NCHW logits, binary targets in {0, 1}
    x = jax.random.normal(kx, (2, 4, 16, 16), dtype=jnp.float32) * 2.0
    t = jax.random.bernoulli(kt, p=0.3, shape=(2, 4, 16, 16)).astype(jnp.float32)

    out = focal_loss(x, t)
    jax.block_until_ready(out)

    ref = focal_loss_ref(x, t)
    assert jnp.allclose(out, ref, rtol=1e-5, atol=1e-6), (out, ref)
    print("KERNEL_OK")
</pallas_src>

<mosaic_0001>
module attributes {stable_mosaic.version = 11 : i64} {
  func.func @_focal_single_kernel(%arg0: i32, %arg1: memref<16x128xf32, #tpu.memory_space<vmem>>, %arg2: memref<16x128xf32, #tpu.memory_space<vmem>>, %arg3: memref<1x1xf32, #tpu.memory_space<smem>>) attributes {dimension_semantics = [#tpu.dimension_semantics<arbitrary>], iteration_bounds = array<i64: 1>, scalar_prefetch = 0 : i64, scratch_operands = 0 : i64, tpu.core_type = #tpu.core_type<tc>, window_params = [{pipeline_mode = #tpu.pipeline_mode<synchronous>, transform_indices = @transform_0, window_bounds = array<i64: 16, 128>}, {pipeline_mode = #tpu.pipeline_mode<synchronous>, transform_indices = @transform_1, window_bounds = array<i64: 16, 128>}, {transform_indices = @transform_2, window_bounds = array<i64: 1, 1>}]} {
    %c0 = arith.constant 0 : index
    %c0_0 = arith.constant 0 : index
    %0 = vector.load %arg1[%c0, %c0_0] : memref<16x128xf32, #tpu.memory_space<vmem>>, vector<16x128xf32>
    %c0_1 = arith.constant 0 : index
    %c0_2 = arith.constant 0 : index
    %1 = vector.load %arg2[%c0_1, %c0_2] : memref<16x128xf32, #tpu.memory_space<vmem>>, vector<16x128xf32>
    %2 = arith.negf %0 : vector<16x128xf32>
    %3 = math.exp %2 : vector<16x128xf32>
    %cst = arith.constant 1.000000e+00 : f32
    %4 = vector.broadcast %cst : f32 to vector<16x128xf32>
    %5 = arith.addf %4, %3 : vector<16x128xf32>
    %6 = arith.divf %4, %5 : vector<16x128xf32>
    %cst_3 = arith.constant 0.000000e+00 : f32
    %7 = vector.broadcast %cst_3 : f32 to vector<16x128xf32>
    %8 = arith.maximumf %0, %7 : vector<16x128xf32>
    %9 = arith.mulf %0, %1 : vector<16x128xf32>
    %10 = arith.subf %8, %9 : vector<16x128xf32>
    %11 = math.absf %0 : vector<16x128xf32>
    %cst_4 = arith.constant 0.000000e+00 : f32
    %12 = vector.broadcast %cst_4 : f32 to vector<16x128xf32>
    %13 = arith.subf %12, %11 : vector<16x128xf32>
    %14 = math.exp %13 : vector<16x128xf32>
    %15 = math.log1p %14 : vector<16x128xf32>
    %16 = arith.addf %10, %15 : vector<16x128xf32>
    %17 = arith.mulf %6, %1 : vector<16x128xf32>
    %cst_5 = arith.constant 1.000000e+00 : f32
    %18 = vector.broadcast %cst_5 : f32 to vector<16x128xf32>
    %19 = arith.subf %18, %6 : vector<16x128xf32>
    %cst_6 = arith.constant 1.000000e+00 : f32
    %20 = vector.broadcast %cst_6 : f32 to vector<16x128xf32>
    %21 = arith.subf %20, %1 : vector<16x128xf32>
    %22 = arith.mulf %19, %21 : vector<16x128xf32>
    %23 = arith.addf %17, %22 : vector<16x128xf32>
    %cst_7 = arith.constant 1.000000e+00 : f32
    %24 = vector.broadcast %cst_7 : f32 to vector<16x128xf32>
    %25 = arith.subf %24, %23 : vector<16x128xf32>
    %26 = arith.mulf %25, %25 : vector<16x128xf32>
    %cst_8 = arith.constant 9.000000e-02 : f32
    %27 = vector.broadcast %cst_8 : f32 to vector<16x128xf32>
    %28 = arith.mulf %27, %1 : vector<16x128xf32>
    %cst_9 = arith.constant 1.000000e+00 : f32
    %29 = vector.broadcast %cst_9 : f32 to vector<16x128xf32>
    %30 = arith.subf %29, %1 : vector<16x128xf32>
    %cst_10 = arith.constant 9.100000e-01 : f32
    %31 = vector.broadcast %cst_10 : f32 to vector<16x128xf32>
    %32 = arith.mulf %31, %30 : vector<16x128xf32>
    %33 = arith.addf %28, %32 : vector<16x128xf32>
    %34 = arith.mulf %16, %26 : vector<16x128xf32>
    %35 = arith.mulf %34, %33 : vector<16x128xf32>
    %36 = vector.shape_cast %35 : vector<16x128xf32> to vector<1x16x128xf32>
    %cst_11 = arith.constant dense<0.000000e+00> : vector<1xf32>
    %37 = vector.multi_reduction <add>, %36, %cst_11 [1, 2] : vector<1x16x128xf32> to vector<1xf32>
    %38 = vector.shape_cast %37 : vector<1xf32> to vector<1x1x1xf32>
    %39 = vector.extract %38[0, 0, 0] : f32 from vector<1x1x1xf32>
    %cst_12 = arith.constant 4.8828125E-4 : f32
    %40 = arith.mulf %39, %cst_12 : f32
    %c0_13 = arith.constant 0 : index
    %c0_14 = arith.constant 0 : index
    %41 = memref.load %arg3[%c0_13, %c0_14] : memref<1x1xf32, #tpu.memory_space<smem>>
    memref.store %40, %arg3[%c0_13, %c0_14] : memref<1x1xf32, #tpu.memory_space<smem>>
    return
  }
  func.func @transform_0(%arg0: i32) -> (i32, i32) {
    %c0_i32 = arith.constant 0 : i32
    %c0_i32_0 = arith.constant 0 : i32
    %c0_i32_1 = arith.constant 0 : i32
    return %c0_i32, %c0_i32_0 : i32, i32
  }
  func.func @transform_1(%arg0: i32) -> (i32, i32) {
    %c0_i32 = arith.constant 0 : i32
    %c0_i32_0 = arith.constant 0 : i32
    %c0_i32_1 = arith.constant 0 : i32
    return %c0_i32, %c0_i32_0 : i32, i32
  }
  func.func @transform_2(%arg0: i32) -> (i32, i32) {
    %c0_i32 = arith.constant 0 : i32
    %c0_i32_0 = arith.constant 0 : i32
    %c0_i32_1 = arith.constant 0 : i32
    return %c0_i32, %c0_i32_0 : i32, i32
  }
}

</mosaic_0001>

<llo_original>
// kernel: tpu_custom_call.1
$region0: #{tpu_custom_call.1}
  #allocation0 [shape = 'u32[]', space=smem, size = 0x4, offset = 0x4, fixed_abs, tag = 'smem constant byte address 0x4 - core index']
  #allocation1 [shape = 'u32[144,128]{1,0:T(1,128)}', space=vmem, size = 0x12000, scoped, tag = 'internal scratch']
  %s0 = inlined_call_operand.hbm [shape: f32[16,128], index: 0, kind: input, shape index: {}]
  %s1 = inlined_call_operand.hbm [shape: f32[16,128], index: 1, kind: input, shape index: {}]
  %s2 = inlined_call_operand.hbm [shape: f32[1,1], index: 2, kind: output, shape index: {}]
  %s3 = sld [smem:[#allocation0]]
  $region26: #{tpu_custom_call.1} parent=0
    _
  %s5 = ssub.s32 1, %s3
  %s6 = scalar_select 0, %s5, %s3
  $region1: #{tpu_custom_call.1} parent=0
    #allocation2 [shape = 'u8[8192]{0}', space=vmem, size = 0x2000, scoped, tag = 'input window, operand 0, single buffered']
    #allocation3 [shape = 's32[1]{0}', space=sflag, size = 0x4, scoped, tag = 'scoped memory for tpu_custom_call.1']
    #allocation4 [shape = 's32[1]{0}', space=sflag, size = 0x4, scoped, tag = 'scoped memory for tpu_custom_call.1']
    #allocation5 [shape = 'u8[8192]{0}', space=vmem, size = 0x2000, scoped, tag = 'input window, operand 1, single buffered']
    #allocation6 [shape = 's32[1]{0}', space=sflag, size = 0x4, scoped, tag = 'scoped memory for tpu_custom_call.1']
    #allocation7 [shape = 'u8[512]{0}', space=smem, size = 0x200, scoped, tag = 'output window, operand 0, single buffered']
    %7 = vsyncpa [#allocation3], 0
    %8 = vsyncpa [#allocation6], 0
    %9 = vsyncpa [#allocation4], 0
    // Predicated region
    $region2: #{tpu_custom_call.1} parent=1 // pred_check
      _
    $region3: #{tpu_custom_call.1} parent=1 // pred_check_branch
      %11 = sbr.rel (0) target = $region5
    $region4: #{tpu_custom_call.1} parent=1 // pred_region
      %s13 = ssub.s32 256, 256
      %14 = vsyncadd [#allocation3], %s13
      %s15 = sshll.u32 [#allocation2], 4
      %s16 = int_to_ptr.vmem [resolvable:$true] %s15
      %21 = dma.hbm_to_vmem [thread:$0]  %s0, 256, %s16, [#allocation3], 128, 128, 8
    $region5: #{tpu_custom_call.1} parent=1 // pred_fallthru
      _
    // Predicated region
    $region6: #{tpu_custom_call.1} parent=1 // pred_check
      _
    $region7: #{tpu_custom_call.1} parent=1 // pred_check_branch
      %23 = sbr.rel (0) target = $region9
    $region8: #{tpu_custom_call.1} parent=1 // pred_region
      %s25 = ssub.s32 256, 256
      %26 = vsyncadd [#allocation6], %s25
      %s27 = sshll.u32 [#allocation5], 4
      %s28 = int_to_ptr.vmem [resolvable:$true] %s27
      %33 = dma.hbm_to_vmem [thread:$0]  %s1, 256, %s28, [#allocation6], 128, 128, 8
    $region9: #{tpu_custom_call.1} parent=1 // pred_fallthru
      _
    // Predicated region
    $region10: #{tpu_custom_call.1} parent=1 // pred_check
      _
    $region11: #{tpu_custom_call.1} parent=1 // pred_check_branch
      %35 = sbr.rel (0) target = $region13
    $region12: #{tpu_custom_call.1} parent=1 // pred_region
      %36 = dma.done [#allocation3], 256
    $region13: #{tpu_custom_call.1} parent=1 // pred_fallthru
      _
    // Predicated region
    $region14: #{tpu_custom_call.1} parent=1 // pred_check
      _
    $region15: #{tpu_custom_call.1} parent=1 // pred_check_branch
      %38 = sbr.rel (0) target = $region17
    $region16: #{tpu_custom_call.1} parent=1 // pred_region
      %39 = dma.done [#allocation6], 256
    $region17: #{tpu_custom_call.1} parent=1 // pred_fallthru
      _
    %v40 = vld [vmem:[#allocation2] sm:$0xff]
    %v41 = vld [vmem:[#allocation2 + $0x8] sm:$0xff]
    %v42 = vld [vmem:[#allocation5] sm:$0xff]
    %v43 = vld [vmem:[#allocation5 + $0x8] sm:$0xff]
    %v44 = vxor.u32 %v40, 2147483648
    %v45 = vxor.u32 %v41, 2147483648
    %v46 = vmul.f32 %v44, 1.442695
    %v47 = vpow.pop %v46
    %v48 = vmul.f32 %v45, 1.442695
    %v49 = vpow.pop %v48
    %v50 = vadd.f32 %v47, 1.0
    %v51 = vadd.f32 %v49, 1.0
    %v52 = vrcp.pop %v50
    %v53 = vmul.f32 1.0, %v52
    %v54 = vrcp.pop %v51
    %v55 = vmul.f32 1.0, %v54
    %v56 = vmax.f32 %v40, 0.0
    %v57 = vmax.f32 %v41, 0.0
    %v58 = vmul.f32 %v40, %v42
    %v59 = vmul.f32 %v41, %v43
    %v60 = vsub.f32 %v56, %v58
    %v61 = vsub.f32 %v57, %v59
    %v62 = vand.u32 2147483647, %v40
    %v63 = vand.u32 2147483647, %v41
    %v64 = vsub.f32 0.0, %v62
    %v65 = vsub.f32 0.0, %v63
    %v66 = vmul.f32 %v64, 1.442695
    %v67 = vpow.pop %v66
    %v68 = vmul.f32 %v65, 1.442695
    %v69 = vpow.pop %v68
    %v70 = vadd.f32 %v67, 1.0
    %v71 = vlog2.pop %v70
    %v72 = vmul.f32 %v71, 0.6931472
    %v73 = vmul.f32 -0.5, %v67
    %v74 = vadd.f32 %v73, 1.0
    %v75 = vmul.f32 %v74, %v67
    %v76 = vand.u32 2147483647, %v67
    %vm77 = vcmp.lt.f32.partialorder %v76, 0.0004427343
    %v78 = vsel %vm77, %v75, %v72
    %v79 = vadd.f32 %v69, 1.0
    %v80 = vlog2.pop %v79
    %v81 = vmul.f32 %v80, 0.6931472
    %v82 = vmul.f32 -0.5, %v69
    %v83 = vadd.f32 %v82, 1.0
    %v84 = vmul.f32 %v83, %v69
    %v85 = vand.u32 2147483647, %v69
    %vm86 = vcmp.lt.f32.partialorder %v85, 0.0004427343
    %v87 = vsel %vm86, %v84, %v81
    %v88 = vadd.f32 %v60, %v78
    %v89 = vadd.f32 %v61, %v87
    %v90 = vmul.f32 %v53, %v42
    %v91 = vmul.f32 %v55, %v43
    %v92 = vsub.f32 1.0, %v53
    %v93 = vsub.f32 1.0, %v55
    %v94 = vsub.f32 1.0, %v42
    %v95 = vsub.f32 1.0, %v43
    %v96 = vmul.f32 %v92, %v94
    %v97 = vmul.f32 %v93, %v95
    %v98 = vadd.f32 %v90, %v96
    %v99 = vadd.f32 %v91, %v97
    %v100 = vsub.f32 1.0, %v98
    %v101 = vsub.f32 1.0, %v99
    %v102 = vmul.f32 %v100, %v100
    %v103 = vmul.f32 %v101, %v101
    %v104 = vmul.f32 %v42, 0.09
    %v105 = vmul.f32 %v43, 0.09
    %v106 = vmul.f32 %v94, 0.91
    %v107 = vmul.f32 %v95, 0.91
    %v108 = vadd.f32 %v104, %v106
    %v109 = vadd.f32 %v105, %v107
    %v110 = vmul.f32 %v88, %v102
    %v111 = vmul.f32 %v89, %v103
    %v112 = vmul.f32 %v110, %v108
    %v113 = vmul.f32 %v111, %v109
    %v114 = vadd.f32 %v112, %v113
    %115 = vadd.xlane.f32.xlu0 %v114
    %v116 = vpop.xlane.xlu0 %115
    %v117 = vrot.slane %v116, 4
    %v118 = vadd.f32 %v116, %v117
    %v119 = vrot.slane %v118, 2
    %v120 = vadd.f32 %v118, %v119
    %v121 = vrot.slane %v120, 1
    %v122 = vadd.f32 %v120, %v121
    %s123 = vtos %v122
    %s124 = smul.f32 %s123, 0.00048828125
    %s125 = scalar_lea.smem [#allocation7], 0
    %126 = sst [smem:[%s125]] %s124
    // Predicated region
    $region18: #{tpu_custom_call.1} parent=1 // pred_check
      _
    $region19: #{tpu_custom_call.1} parent=1 // pred_check_branch
      %128 = sbr.rel (0) target = $region21
    $region20: #{tpu_custom_call.1} parent=1 // pred_region
      %s130 = ssub.s32 16, 16
      %131 = vsyncadd [#allocation4], %s130
      %134 = dma.smem_to_hbm [#allocation7], 16, %s2, [#allocation4]
    $region21: #{tpu_custom_call.1} parent=1 // pred_fallthru
      _
    // Predicated region
    $region22: #{tpu_custom_call.1} parent=1 // pred_check
      _
    $region23: #{tpu_custom_call.1} parent=1 // pred_check_branch
      %136 = sbr.rel (0) target = $region25
    $region24: #{tpu_custom_call.1} parent=1 // pred_region
      %137 = dma.done [#allocation4], 16
    $region25: #{tpu_custom_call.1} parent=1 // pred_fallthru
      _
    %138 = sfence
    %139 = vsyncpa [#allocation3], 1
    %140 = vsyncpa [#allocation6], 1
    %141 = vsyncpa [#allocation4], 1

</llo_original>
